<compile_context>
chip_gen: v7x
topology: tpu7x:2x2x1
jax: 0.10.0
libtpu: 0.0.40
codegen_flags: <defaults>
</compile_context>

<pallas_src>
import jax
import jax.numpy as jnp
from jax.experimental import pallas as pl
from jax.experimental.pallas import tpu as pltpu


OUT_LANES = 128  # pad the action head to a full lane width -> unmasked stores


def _round_up(n: int, m: int) -> int:
    return ((n + m - 1) // m) * m


def policy_mlp_kernel(x_ref, w1_ref, b1_ref, w2_ref, b2_ref, w3_ref, b3_ref,
                      out_ref):
    # x_ref: (TB, D_in); weights/biases: full VMEM-resident blocks;
    # out_ref: (TB, OUT_LANES) lane-dense (columns >= num_actions are pad).
    w_dtype = w1_ref.dtype  # f32 or bf16 (MXU operand dtype)
    x = x_ref[...].astype(w_dtype)

    # Layer 1: Linear (MXU, f32 accumulate) + bias + ReLU in f32
    h1 = jnp.dot(x, w1_ref[...], preferred_element_type=jnp.float32)
    h1 = jnp.maximum(h1 + b1_ref[...].astype(jnp.float32), 0.0)

    # Layer 2: Linear + bias + ReLU
    h2 = jnp.dot(h1.astype(w_dtype), w2_ref[...],
                 preferred_element_type=jnp.float32)
    h2 = jnp.maximum(h2 + b2_ref[...].astype(jnp.float32), 0.0)

    # Action head: Linear + bias + tanh (EUP) -> actions in [-1, 1]
    a = jnp.dot(h2.astype(w_dtype), w3_ref[...],
                preferred_element_type=jnp.float32)
    a = jnp.tanh(a + b3_ref[...].astype(jnp.float32))

    out_ref[...] = a.astype(out_ref.dtype)


def init_params(key, input_size, hidden_size, num_actions):
    """PyTorch-Linear-style init (f32): U(-1/sqrt(fan_in), 1/sqrt(fan_in))."""
    def linear(k, fan_in, fan_out):
        kw, kb = jax.random.split(k)
        bound = 1.0 / float(fan_in) ** 0.5
        w = jax.random.uniform(kw, (fan_in, fan_out), jnp.float32, -bound, bound)
        b = jax.random.uniform(kb, (1, fan_out), jnp.float32, -bound, bound)
        return w, b

    k1, k2, k3 = jax.random.split(key, 3)
    w1, b1 = linear(k1, input_size, hidden_size)
    w2, b2 = linear(k2, hidden_size, hidden_size)
    w3, b3 = linear(k3, hidden_size, num_actions)
    return (w1, b1, w2, b2, w3, b3)


def prepare_policy_params(raw_params, weight_dtype=jnp.bfloat16):
    """One-time param prep -- call OUTSIDE the inference loop.

    * zero-pads the action head to a full 128-lane width (unmasked stores),
    * casts weights to the MXU operand dtype (bf16 by default),
    * keeps biases in f32 (bias/activation math stays f32 in the kernel).
    """
    w1, b1, w2, b2, w3, b3 = raw_params
    num_actions = w3.shape[1]
    pad = _round_up(max(num_actions, 1), OUT_LANES) - num_actions
    w3p = jnp.pad(w3, ((0, 0), (0, pad)))
    b3p = jnp.pad(b3, ((0, 0), (0, pad)))
    return (w1.astype(weight_dtype), b1.astype(jnp.float32),
            w2.astype(weight_dtype), b2.astype(jnp.float32),
            w3p.astype(weight_dtype), b3p.astype(jnp.float32))


def base_policy_forward(state, prepared_params, num_actions, *,
                        block_batch=512, out_dtype=jnp.float32):
    """a = tanh(MLP(state)); fused 3-layer policy MLP in one pallas_call."""
    w1, b1, w2, b2, w3p, b3p = prepared_params
    batch, d_in = state.shape
    hidden = w1.shape[1]
    out_lanes = w3p.shape[1]
    assert w1.dtype == w2.dtype == w3p.dtype, "weights must share one MXU dtype"
    assert out_lanes % 128 == 0 and num_actions <= out_lanes

    # Tile-count-first batch tiling (see module header).  Splitting into >= 2
    # grid steps only pays on v7x (2 TensorCores), so only do it when the
    # batch is big enough to amortize the extra per-step overhead.
    min_tiles = 2 if batch >= 64 else 1
    n_tiles = max(min_tiles, pl.cdiv(_round_up(batch, 8), block_batch))
    tb = _round_up(pl.cdiv(batch, n_tiles), 8)
    b_pad = n_tiles * tb
    if b_pad != batch:
        state = jnp.pad(state, ((0, b_pad - batch), (0, 0)))
    # TODO(synk): if d_in ever grows large, pad state lanes to a multiple of
    # 128 upstream (once) so the x-tile DMA stays on the lane-dense fast path.

    # Parameters use a constant index_map -> stay VMEM-resident across the
    # (pipelined) batch grid; only the x / out tiles stream HBM<->VMEM.
    resident = lambda arr: pl.BlockSpec(arr.shape, lambda i: (0,) * arr.ndim)

    # VMEM budget: double-buffered streamed tiles + (default double-buffered)
    # resident weights + f32 intermediates, plus slack.
    weight_bytes = sum(int(p.size) * p.dtype.itemsize
                       for p in (w1, b1, w2, b2, w3p, b3p))
    stream_bytes = (tb * d_in * state.dtype.itemsize
                    + tb * out_lanes * jnp.dtype(out_dtype).itemsize)
    inter_bytes = tb * (2 * hidden + out_lanes) * 4
    vmem_limit = 2 * stream_bytes + 2 * weight_bytes + inter_bytes + (2 << 20)
    vmem_limit = int(min(max(vmem_limit, 16 << 20), 128 << 20))

    flops = 2 * b_pad * (d_in * hidden + hidden * hidden + hidden * out_lanes)
    bytes_accessed = (b_pad * d_in * state.dtype.itemsize
                      + b_pad * out_lanes * jnp.dtype(out_dtype).itemsize
                      + weight_bytes)

    out = pl.pallas_call(
        policy_mlp_kernel,
        out_shape=jax.ShapeDtypeStruct((b_pad, out_lanes), out_dtype),
        grid=(n_tiles,),
        in_specs=[
            pl.BlockSpec((tb, d_in), lambda i: (i, 0)),
            resident(w1), resident(b1),
            resident(w2), resident(b2),
            resident(w3p), resident(b3p),
        ],
        out_specs=pl.BlockSpec((tb, out_lanes), lambda i: (i, 0)),
        compiler_params=pltpu.CompilerParams(
            dimension_semantics=("parallel",),
            vmem_limit_bytes=vmem_limit),
        cost_estimate=pl.CostEstimate(
            flops=int(flops),
            transcendentals=int(b_pad * out_lanes),
            bytes_accessed=int(bytes_accessed)),
    )(state, w1, b1, w2, b2, w3p, b3p)

    # Strip batch padding and the lane padding of the action head.
    return out[:batch, :num_actions]


# TODO(synk): the stochastic Gaussian policy variant (Normal + TanhTransform
# sampling / log_prob) is a distribution-level op and is kept outside the
# kernel; only the deterministic tanh-MLP forward is fused here.


if __name__ == "__main__":
    # Small shapes consistent with a policy: state_dim=12 -> 4 actions.
    # hidden=256 fills the 256x256 MXU on v6e/v7x; still optimal on v5e.
    batch, state_dim, num_actions, hidden_size = 8, 12, 4, 256

    key = jax.random.PRNGKey(0)
    k_state, k_state2, k_params = jax.random.split(key, 3)
    state = jax.random.normal(k_state, (batch, state_dim), jnp.float32)

    raw_params = init_params(k_params, state_dim, hidden_size, num_actions)
    w1, b1, w2, b2, w3, b3 = raw_params

    def ref_forward(x):
        h1 = jnp.maximum(x @ w1 + b1, 0.0)
        h2 = jnp.maximum(h1 @ w2 + b2, 0.0)
        return jnp.tanh(h2 @ w3 + b3)

    # ---- f32 weights: strict check against a plain-JAX reference ----
    params_f32 = prepare_policy_params(raw_params, weight_dtype=jnp.float32)
    a_f32 = jax.block_until_ready(
        base_policy_forward(state, params_f32, num_actions))
    a_ref = ref_forward(state)
    assert a_f32.shape == (batch, num_actions)
    assert jnp.allclose(a_f32, a_ref, atol=1e-5, rtol=1e-5)

    # ---- bf16 weights (default inference path; f32 accumulate/activations) --
    params_bf16 = prepare_policy_params(raw_params)
    a_bf16 = jax.block_until_ready(
        base_policy_forward(state, params_bf16, num_actions))
    assert a_bf16.shape == (batch, num_actions)
    assert jnp.allclose(a_bf16, a_ref, atol=5e-2, rtol=5e-2)

    # ---- larger / awkward batch: exercises the multi-tile 'parallel' grid ---
    big_batch = 200  # -> 2 grid steps of 104 rows (8 padded rows total)
    state_big = jax.random.normal(k_state2, (big_batch, state_dim), jnp.float32)
    a_big = jax.block_until_ready(
        base_policy_forward(state_big, params_bf16, num_actions))
    assert a_big.shape == (big_batch, num_actions)
    assert jnp.allclose(a_big, ref_forward(state_big), atol=5e-2, rtol=5e-2)

    print("KERNEL_OK")
</pallas_src>

<mosaic_0001>
module attributes {stable_mosaic.version = 11 : i64} {
  func.func @policy_mlp_kernel(%arg0: i32, %arg1: memref<8x12xf32, #tpu.memory_space<vmem>>, %arg2: memref<12x256xf32, #tpu.memory_space<vmem>>, %arg3: memref<1x256xf32, #tpu.memory_space<vmem>>, %arg4: memref<256x256xf32, #tpu.memory_space<vmem>>, %arg5: memref<1x256xf32, #tpu.memory_space<vmem>>, %arg6: memref<256x128xf32, #tpu.memory_space<vmem>>, %arg7: memref<1x128xf32, #tpu.memory_space<vmem>>, %arg8: memref<8x128xf32, #tpu.memory_space<vmem>>) attributes {dimension_semantics = [#tpu.dimension_semantics<parallel>], iteration_bounds = array<i64: 1>, scalar_prefetch = 0 : i64, scratch_operands = 0 : i64, tpu.core_type = #tpu.core_type<tc>, window_params = [{transform_indices = @transform_0, window_bounds = array<i64: 8, 12>}, {pipeline_mode = #tpu.pipeline_mode<synchronous>, transform_indices = @transform_1, window_bounds = array<i64: 12, 256>}, {pipeline_mode = #tpu.pipeline_mode<synchronous>, transform_indices = @transform_2, window_bounds = array<i64: 1, 256>}, {pipeline_mode = #tpu.pipeline_mode<synchronous>, transform_indices = @transform_3, window_bounds = array<i64: 256, 256>}, {pipeline_mode = #tpu.pipeline_mode<synchronous>, transform_indices = @transform_4, window_bounds = array<i64: 1, 256>}, {pipeline_mode = #tpu.pipeline_mode<synchronous>, transform_indices = @transform_5, window_bounds = array<i64: 256, 128>}, {pipeline_mode = #tpu.pipeline_mode<synchronous>, transform_indices = @transform_6, window_bounds = array<i64: 1, 128>}, {transform_indices = @transform_7, window_bounds = array<i64: 8, 128>}]} {
    %c0 = arith.constant 0 : index
    %c0_0 = arith.constant 0 : index
    %0 = vector.load %arg1[%c0, %c0_0] : memref<8x12xf32, #tpu.memory_space<vmem>>, vector<8x12xf32>
    %c0_1 = arith.constant 0 : index
    %c0_2 = arith.constant 0 : index
    %1 = vector.load %arg2[%c0_1, %c0_2] : memref<12x256xf32, #tpu.memory_space<vmem>>, vector<12x256xf32>
    %cst = arith.constant dense<0.000000e+00> : vector<8x256xf32>
    %2 = tpu.matmul %0, %1, %cst {dimension_numbers = #tpu.dot_dimension_numbers<[1], [0], [0], [1], [0, 0, 1, 1], [], []>} : vector<8x12xf32>, vector<12x256xf32>, vector<8x256xf32> -> vector<8x256xf32>
    %c0_3 = arith.constant 0 : index
    %c0_4 = arith.constant 0 : index
    %3 = vector.load %arg3[%c0_3, %c0_4] : memref<1x256xf32, #tpu.memory_space<vmem>>, vector<1x256xf32>
    %4 = vector.broadcast %3 : vector<1x256xf32> to vector<8x256xf32>
    %5 = arith.addf %2, %4 : vector<8x256xf32>
    %cst_5 = arith.constant 0.000000e+00 : f32
    %6 = vector.broadcast %cst_5 : f32 to vector<8x256xf32>
    %7 = arith.maximumf %5, %6 : vector<8x256xf32>
    %c0_6 = arith.constant 0 : index
    %c0_7 = arith.constant 0 : index
    %8 = vector.load %arg4[%c0_6, %c0_7] : memref<256x256xf32, #tpu.memory_space<vmem>>, vector<256x256xf32>
    %cst_8 = arith.constant dense<0.000000e+00> : vector<8x256xf32>
    %9 = tpu.matmul %7, %8, %cst_8 {dimension_numbers = #tpu.dot_dimension_numbers<[1], [0], [0], [1], [0, 0, 1, 1], [], []>} : vector<8x256xf32>, vector<256x256xf32>, vector<8x256xf32> -> vector<8x256xf32>
    %c0_9 = arith.constant 0 : index
    %c0_10 = arith.constant 0 : index
    %10 = vector.load %arg5[%c0_9, %c0_10] : memref<1x256xf32, #tpu.memory_space<vmem>>, vector<1x256xf32>
    %11 = vector.broadcast %10 : vector<1x256xf32> to vector<8x256xf32>
    %12 = arith.addf %9, %11 : vector<8x256xf32>
    %cst_11 = arith.constant 0.000000e+00 : f32
    %13 = vector.broadcast %cst_11 : f32 to vector<8x256xf32>
    %14 = arith.maximumf %12, %13 : vector<8x256xf32>
    %c0_12 = arith.constant 0 : index
    %c0_13 = arith.constant 0 : index
    %15 = vector.load %arg6[%c0_12, %c0_13] : memref<256x128xf32, #tpu.memory_space<vmem>>, vector<256x128xf32>
    %cst_14 = arith.constant dense<0.000000e+00> : vector<8x128xf32>
    %16 = tpu.matmul %14, %15, %cst_14 {dimension_numbers = #tpu.dot_dimension_numbers<[1], [0], [0], [1], [0, 0, 1, 1], [], []>} : vector<8x256xf32>, vector<256x128xf32>, vector<8x128xf32> -> vector<8x128xf32>
    %c0_15 = arith.constant 0 : index
    %c0_16 = arith.constant 0 : index
    %17 = vector.load %arg7[%c0_15, %c0_16] : memref<1x128xf32, #tpu.memory_space<vmem>>, vector<1x128xf32>
    %18 = vector.broadcast %17 : vector<1x128xf32> to vector<8x128xf32>
    %19 = arith.addf %16, %18 : vector<8x128xf32>
    %20 = math.tanh %19 : vector<8x128xf32>
    %c0_17 = arith.constant 0 : index
    %c0_18 = arith.constant 0 : index
    %21 = vector.load %arg8[%c0_17, %c0_18] : memref<8x128xf32, #tpu.memory_space<vmem>>, vector<8x128xf32>
    tpu.vector_store %arg8[%c0_17, %c0_18], %20 {strides = array<i32>} : memref<8x128xf32, #tpu.memory_space<vmem>>, vector<8x128xf32>,
    return
  }
  func.func @transform_0(%arg0: i32) -> (i32, i32) {
    %c0_i32 = arith.constant 0 : i32
    %c0_i32_0 = arith.constant 0 : i32
    return %arg0, %c0_i32 : i32, i32
  }
  func.func @transform_1(%arg0: i32) -> (i32, i32) {
    %c0_i32 = arith.constant 0 : i32
    %c0_i32_0 = arith.constant 0 : i32
    %c0_i32_1 = arith.constant 0 : i32
    return %c0_i32, %c0_i32_0 : i32, i32
  }
  func.func @transform_2(%arg0: i32) -> (i32, i32) {
    %c0_i32 = arith.constant 0 : i32
    %c0_i32_0 = arith.constant 0 : i32
    %c0_i32_1 = arith.constant 0 : i32
    return %c0_i32, %c0_i32_0 : i32, i32
  }
  func.func @transform_3(%arg0: i32) -> (i32, i32) {
    %c0_i32 = arith.constant 0 : i32
    %c0_i32_0 = arith.constant 0 : i32
    %c0_i32_1 = arith.constant 0 : i32
    return %c0_i32, %c0_i32_0 : i32, i32
  }
  func.func @transform_4(%arg0: i32) -> (i32, i32) {
    %c0_i32 = arith.constant 0 : i32
    %c0_i32_0 = arith.constant 0 : i32
    %c0_i32_1 = arith.constant 0 : i32
    return %c0_i32, %c0_i32_0 : i32, i32
  }
  func.func @transform_5(%arg0: i32) -> (i32, i32) {
    %c0_i32 = arith.constant 0 : i32
    %c0_i32_0 = arith.constant 0 : i32
    %c0_i32_1 = arith.constant 0 : i32
    return %c0_i32, %c0_i32_0 : i32, i32
  }
  func.func @transform_6(%arg0: i32) -> (i32, i32) {
    %c0_i32 = arith.constant 0 : i32
    %c0_i32_0 = arith.constant 0 : i32
    %c0_i32_1 = arith.constant 0 : i32
    return %c0_i32, %c0_i32_0 : i32, i32
  }
  func.func @transform_7(%arg0: i32) -> (i32, i32) {
    %c0_i32 = arith.constant 0 : i32
    %c0_i32_0 = arith.constant 0 : i32
    return %arg0, %c0_i32 : i32, i32
  }
}

</mosaic_0001>

<llo_original>
// kernel: tpu_custom_call.1
$region0: #{tpu_custom_call.1}
  #allocation0 [shape = 'u32[]', space=smem, size = 0x4, offset = 0x4, fixed_abs, tag = 'smem constant byte address 0x4 - core index']
  #allocation1 [shape = 'u32[144,128]{1,0:T(1,128)}', space=vmem, size = 0x12000, scoped, tag = 'internal scratch']
  %s0 = inlined_call_operand.hbm [shape: f32[8,12], index: 0, kind: input, shape index: {}]
  %s1 = inlined_call_operand.hbm [shape: f32[12,256], index: 1, kind: input, shape index: {}]
  %s2 = inlined_call_operand.vmem [shape: f32[1,256], index: 2, kind: input, shape index: {}]
  %s3 = inlined_call_operand.hbm [shape: f32[256,256], index: 3, kind: input, shape index: {}]
  %s4 = inlined_call_operand.vmem [shape: f32[1,256], index: 4, kind: input, shape index: {}]
  %s5 = inlined_call_operand.hbm [shape: f32[256,128], index: 5, kind: input, shape index: {}]
  %s6 = inlined_call_operand.vmem [shape: f32[1,128], index: 6, kind: input, shape index: {}]
  %s7 = inlined_call_operand.hbm [shape: f32[8,128], index: 7, kind: output, shape index: {}]
  %s8 = sld [smem:[#allocation0]]
  $region54: #{tpu_custom_call.1} parent=0
    _
  %s10 = ssub.s32 1, %s8
  %s11 = scalar_select 0, %s10, %s8
  $region1: #{tpu_custom_call.1} parent=0
    #allocation2 [shape = 'u8[4096]{0}', space=vmem, size = 0x1000, scoped, tag = 'input window, operand 0, single buffered']
    #allocation3 [shape = 's32[1]{0}', space=sflag, size = 0x4, scoped, tag = 'scoped memory for tpu_custom_call.1']
    #allocation4 [shape = 's32[1]{0}', space=sflag, size = 0x4, scoped, tag = 'scoped memory for tpu_custom_call.1']
    #allocation5 [shape = 'u8[16384]{0}', space=vmem, size = 0x4000, scoped, tag = 'input window, operand 1, single buffered']
    #allocation6 [shape = 's32[1]{0}', space=sflag, size = 0x4, scoped, tag = 'scoped memory for tpu_custom_call.1']
    #allocation7 [shape = 'u8[262144]{0}', space=vmem, size = 0x40000, scoped, tag = 'input window, operand 3, single buffered']
    #allocation8 [shape = 'u8[131072]{0}', space=vmem, size = 0x20000, scoped, tag = 'input window, operand 5, single buffered']
    #allocation9 [shape = 's32[1]{0}', space=sflag, size = 0x4, scoped, tag = 'scoped memory for tpu_custom_call.1']
    #allocation10 [shape = 'u8[4096]{0}', space=vmem, size = 0x1000, scoped, tag = 'output window, operand 0, single buffered']
    %12 = vsyncpa [#allocation3], 0
    %13 = vsyncpa [#allocation6], 0
    %14 = vsyncpa [#allocation9], 0
    %15 = vsyncpa [#allocation4], 0
    // Predicated region
    $region2: #{tpu_custom_call.1} parent=1 // pred_check
      _
    $region3: #{tpu_custom_call.1} parent=1 // pred_check_branch
      %17 = sbr.rel (0) target = $region5
    $region4: #{tpu_custom_call.1} parent=1 // pred_region
      %s19 = ssub.s32 128, 128
      %20 = vsyncadd [#allocation3], %s19
      %s22 = sshll.u32 [#allocation2], 4
      %s23 = int_to_ptr.vmem [resolvable:$true] %s22
      %25 = dma.hbm_to_vmem [thread:$0]  %s0, 128, %s23, [#allocation3]
    $region5: #{tpu_custom_call.1} parent=1 // pred_fallthru
      _
    // Predicated region
    $region6: #{tpu_custom_call.1} parent=1 // pred_check
      _
    $region7: #{tpu_custom_call.1} parent=1 // pred_check_branch
      %27 = sbr.rel (0) target = $region9
    $region8: #{tpu_custom_call.1} parent=1 // pred_region
      %s29 = ssub.s32 512, 512
      %30 = vsyncadd [#allocation6], %s29
      %s31 = sshll.u32 [#allocation5], 4
      %s32 = int_to_ptr.vmem [resolvable:$true] %s31
      %37 = dma.hbm_to_vmem [thread:$0]  %s1, 512, %s32, [#allocation6], 256, 256, 16
    $region9: #{tpu_custom_call.1} parent=1 // pred_fallthru
      _
    // Predicated region
    $region10: #{tpu_custom_call.1} parent=1 // pred_check
      _
    $region11: #{tpu_custom_call.1} parent=1 // pred_check_branch
      %39 = sbr.rel (0) target = $region13
    $region12: #{tpu_custom_call.1} parent=1 // pred_region
      _
    $region13: #{tpu_custom_call.1} parent=1 // pred_fallthru
      _
    // Predicated region
    $region14: #{tpu_custom_call.1} parent=1 // pred_check
      _
    $region15: #{tpu_custom_call.1} parent=1 // pred_check_branch
      %41 = sbr.rel (0) target = $region17
    $region16: #{tpu_custom_call.1} parent=1 // pred_region
      %s43 = ssub.s32 8192, 8192
      %44 = vsyncadd [#allocation6], %s43
      %s45 = sshll.u32 [#allocation7], 4
      %s46 = int_to_ptr.vmem [resolvable:$true] %s45
      %51 = dma.hbm_to_vmem [thread:$0]  %s3, 8192, %s46, [#allocation6], 256, 256, 16
    $region17: #{tpu_custom_call.1} parent=1 // pred_fallthru
      _
    // Predicated region
    $region18: #{tpu_custom_call.1} parent=1 // pred_check
      _
    $region19: #{tpu_custom_call.1} parent=1 // pred_check_branch
      %53 = sbr.rel (0) target = $region21
    $region20: #{tpu_custom_call.1} parent=1 // pred_region
      _
    $region21: #{tpu_custom_call.1} parent=1 // pred_fallthru
      _
    // Predicated region
    $region22: #{tpu_custom_call.1} parent=1 // pred_check
      _
    $region23: #{tpu_custom_call.1} parent=1 // pred_check_branch
      %55 = sbr.rel (0) target = $region25
    $region24: #{tpu_custom_call.1} parent=1 // pred_region
      %s57 = ssub.s32 4096, 4096
      %58 = vsyncadd [#allocation9], %s57
      %s59 = sshll.u32 [#allocation8], 4
      %s60 = int_to_ptr.vmem [resolvable:$true] %s59
      %65 = dma.hbm_to_vmem [thread:$0]  %s5, 4096, %s60, [#allocation9], 128, 128, 8
    $region25: #{tpu_custom_call.1} parent=1 // pred_fallthru
      _
    // Predicated region
    $region26: #{tpu_custom_call.1} parent=1 // pred_check
      _
    $region27: #{tpu_custom_call.1} parent=1 // pred_check_branch
      %67 = sbr.rel (0) target = $region29
    $region28: #{tpu_custom_call.1} parent=1 // pred_region
      _
    $region29: #{tpu_custom_call.1} parent=1 // pred_fallthru
      _
    // Predicated region
    $region30: #{tpu_custom_call.1} parent=1 // pred_check
      _
    $region31: #{tpu_custom_call.1} parent=1 // pred_check_branch
      %69 = sbr.rel (0) target = $region33
    $region32: #{tpu_custom_call.1} parent=1 // pred_region
      %70 = dma.done [#allocation3], 128
    $region33: #{tpu_custom_call.1} parent=1 // pred_fallthru
      _
    // Predicated region
    $region34: #{tpu_custom_call.1} parent=1 // pred_check
      _
    $region35: #{tpu_custom_call.1} parent=1 // pred_check_branch
      %72 = sbr.rel (0) target = $region37
    $region36: #{tpu_custom_call.1} parent=1 // pred_region
      %73 = dma.done [#allocation6], 512
    $region37: #{tpu_custom_call.1} parent=1 // pred_fallthru
      _
    // Predicated region
    $region38: #{tpu_custom_call.1} parent=1 // pred_check
      _
    $region39: #{tpu_custom_call.1} parent=1 // pred_check_branch
      %75 = sbr.rel (0) target = $region41
    $region40: #{tpu_custom_call.1} parent=1 // pred_region
      %76 = dma.done [#allocation6], 8192
    $region41: #{tpu_custom_call.1} parent=1 // pred_fallthru
      _
    // Predicated region
    $region42: #{tpu_custom_call.1} parent=1 // pred_check
      _
    $region43: #{tpu_custom_call.1} parent=1 // pred_check_branch
      %78 = sbr.rel (0) target = $region45
    $region44: #{tpu_custom_call.1} parent=1 // pred_region
      %79 = dma.done [#allocation9], 4096
    $region45: #{tpu_custom_call.1} parent=1 // pred_fallthru
      _
    %v80 = vld [vmem:[#allocation2] sm:$0xff]
    %v81 = vld [vmem:[#allocation5] sm:$0xff]
    %v82 = vld [vmem:[#allocation5 + $0x8] sm:$0xff]
    %v83 = vld [vmem:[#allocation5 + $0x10] sm:$0xf]
    %v84 = vld [vmem:[#allocation5 + $0x18] sm:$0xf]
    %v85 = vld [vmem:[%s2] sm:$0x3]
    %v87 = vlaneseq
    %v88 = vshrl.u32 %v87, 7
    %v89 = vsub.s32 0, %v88
    %v90 = vrot.slane %v85, %v89
    %v91 = vlaneseq
    %v92 = vshrl.u32 %v91, 7
    %v93 = vsub.s32 1, %v92
    %v94 = vrot.slane %v85, %v93
    %vm97 = vcmask 97280
    %v99 = vsel %vm97, %v80, 0
    %vm101 = vcmask 1043456
    %v103 = vsel %vm101, %v83, 0
    %v106 = vsel %vm101, %v84, 0
    %108 = vmatprep.subr.mxu0 %v82
    %109 = vmatpush1.msra.mxu0 %v81
    %110 = vmatprep.subr.mxu0 %v106
    %111 = vmatpush1.msra.mxu0 %v103
    %112 = vmatprep.subr.mxu0 0.0
    %113 = vmatpush1.msra.mxu0 0.0
    %114 = vmatprep.subr.mxu0 0.0
    %115 = vmatpush1.msra.mxu0 0.0
    %116 = vmatprep.subr.mxu0 0.0
    %117 = vmatpush1.msra.mxu0 0.0
    %118 = vmatprep.subr.mxu0 0.0
    %119 = vmatpush1.msra.mxu0 0.0
    %120 = vmatprep.subr.mxu0 0.0
    %121 = vmatpush1.msra.mxu0 0.0
    %122 = vmatprep.subr.mxu0 0.0
    %123 = vmatpush1.msra.mxu0 0.0
    %124 = vmatprep.subr.mxu0 0.0
    %125 = vmatpush1.msra.mxu0 0.0
    %126 = vmatprep.subr.mxu0 0.0
    %127 = vmatpush1.msra.mxu0 0.0
    %128 = vmatprep.subr.mxu0 0.0
    %129 = vmatpush1.msra.mxu0 0.0
    %130 = vmatprep.subr.mxu0 0.0
    %131 = vmatpush1.msra.mxu0 0.0
    %132 = vmatprep.subr.mxu0 0.0
    %133 = vmatpush1.msra.mxu0 0.0
    %134 = vmatprep.subr.mxu0 0.0
    %135 = vmatpush1.msra.mxu0 0.0
    %136 = vmatprep.subr.mxu0 0.0
    %137 = vmatpush1.msra.mxu0 0.0
    %138 = vmatprep.subr.mxu0 0.0
    %139 = vmatpush1.msra.mxu0 0.0
    %140 = vmatprep.subr.mxu0 0.0
    %141 = vmatpush1.msra.mxu0 0.0
    %142 = vmatprep.subr.mxu0 0.0
    %143 = vmatpush1.msra.mxu0 0.0
    %144 = vmatprep.subr.mxu0 0.0
    %145 = vmatpush1.msra.mxu0 0.0
    %146 = vmatprep.subr.mxu0 0.0
    %147 = vmatpush1.msra.mxu0 0.0
    %148 = vmatprep.subr.mxu0 0.0
    %149 = vmatpush1.msra.mxu0 0.0
    %150 = vmatprep.subr.mxu0 0.0
    %151 = vmatpush1.msra.mxu0 0.0
    %152 = vmatprep.subr.mxu0 0.0
    %153 = vmatpush1.msra.mxu0 0.0
    %154 = vmatprep.subr.mxu0 0.0
    %155 = vmatpush1.msra.mxu0 0.0
    %156 = vmatprep.subr.mxu0 0.0
    %157 = vmatpush1.msra.mxu0 0.0
    %158 = vmatprep.subr.mxu0 0.0
    %159 = vmatpush1.msra.mxu0 0.0
    %160 = vmatprep.subr.mxu0 0.0
    %161 = vmatpush1.msra.mxu0 0.0
    %162 = vmatprep.subr.mxu0 0.0
    %163 = vmatpush1.msra.mxu0 0.0
    %164 = vmatprep.subr.mxu0 0.0
    %165 = vmatpush1.msra.mxu0 0.0
    %166 = vmatprep.subr.mxu0 0.0
    %167 = vmatpush1.msra.mxu0 0.0
    %168 = vmatprep.subr.mxu0 0.0
    %169 = vmatpush1.msra.mxu0 0.0
    %170 = vmatprep.subr.mxu0 0.0
    %171 = vmatpush1.msra.mxu0 0.0
    %172 = vmatprep.mubr.f32.mxu0 0.0
    %173 = vmatmul.mubr.f32.gmra.mrb[0].mxu0 %v99
    %v174 = vpop.f32.mrb[0].mxu0
    %v175 = vadd.f32 %v90, %v174
    %v176 = vpop.f32.mrb[0].mxu0
    %v177 = vadd.f32 %v94, %v176
    %178 = vdwg.mxu0
    %v179 = vmax.f32 %v175, 0.0
    %v180 = vmax.f32 %v177, 0.0
    %v181 = vld [vmem:[#allocation7] sm:$0xff]
    %v182 = vld [vmem:[#allocation7 + $0x8] sm:$0xff]
    %v183 = vld [vmem:[#allocation7 + $0x10] sm:$0xff]
    %v184 = vld [vmem:[#allocation7 + $0x18] sm:$0xff]
    %v185 = vld [vmem:[#allocation7 + $0x20] sm:$0xff]
    %v186 = vld [vmem:[#allocation7 + $0x28] sm:$0xff]
    %v187 = vld [vmem:[#allocation7 + $0x30] sm:$0xff]
    %v188 = vld [vmem:[#allocation7 + $0x38] sm:$0xff]
    %v189 = vld [vmem:[#allocation7 + $0x40] sm:$0xff]
    %v190 = vld [vmem:[#allocation7 + $0x48] sm:$0xff]
    %v191 = vld [vmem:[#allocation7 + $0x50] sm:$0xff]
    %v192 = vld [vmem:[#allocation7 + $0x58] sm:$0xff]
    %v193 = vld [vmem:[#allocation7 + $0x60] sm:$0xff]
    %v194 = vld [vmem:[#allocation7 + $0x68] sm:$0xff]
    %v195 = vld [vmem:[#allocation7 + $0x70] sm:$0xff]
    %v196 = vld [vmem:[#allocation7 + $0x78] sm:$0xff]
    %v197 = vld [vmem:[#allocation7 + $0x80] sm:$0xff]
    %v198 = vld [vmem:[#allocation7 + $0x88] sm:$0xff]
    %v199 = vld [vmem:[#allocation7 + $0x90] sm:$0xff]
    %v200 = vld [vmem:[#allocation7 + $0x98] sm:$0xff]
    %v201 = vld [vmem:[#allocation7 + $0xa0] sm:$0xff]
    %v202 = vld [vmem:[#allocation7 + $0xa8] sm:$0xff]
    %v203 = vld [vmem:[#allocation7 + $0xb0] sm:$0xff]
    %v204 = vld [vmem:[#allocation7 + $0xb8] sm:$0xff]
    %v205 = vld [vmem:[#allocation7 + $0xc0] sm:$0xff]
    %v206 = vld [vmem:[#allocation7 + $0xc8] sm:$0xff]
    %v207 = vld [vmem:[#allocation7 + $0xd0] sm:$0xff]
    %v208 = vld [vmem:[#allocation7 + $0xd8] sm:$0xff]
    %v209 = vld [vmem:[#allocation7 + $0xe0] sm:$0xff]
    %v210 = vld [vmem:[#allocation7 + $0xe8] sm:$0xff]
    %v211 = vld [vmem:[#allocation7 + $0xf0] sm:$0xff]
    %v212 = vld [vmem:[#allocation7 + $0xf8] sm:$0xff]
    %v213 = vld [vmem:[#allocation7 + $0x100] sm:$0xff]
    %v214 = vld [vmem:[#allocation7 + $0x108] sm:$0xff]
    %v215 = vld [vmem:[#allocation7 + $0x110] sm:$0xff]
    %v216 = vld [vmem:[#allocation7 + $0x118] sm:$0xff]
    %v217 = vld [vmem:[#allocation7 + $0x120] sm:$0xff]
    %v218 = vld [vmem:[#allocation7 + $0x128] sm:$0xff]
    %v219 = vld [vmem:[#allocation7 + $0x130] sm:$0xff]
    %v220 = vld [vmem:[#allocation7 + $0x138] sm:$0xff]
    %v221 = vld [vmem:[#allocation7 + $0x140] sm:$0xff]
    %v222 = vld [vmem:[#allocation7 + $0x148] sm:$0xff]
    %v223 = vld [vmem:[#allocation7 + $0x150] sm:$0xff]
    %v224 = vld [vmem:[#allocation7 + $0x158] sm:$0xff]
    %v225 = vld [vmem:[#allocation7 + $0x160] sm:$0xff]
    %v226 = vld [vmem:[#allocation7 + $0x168] sm:$0xff]
    %v227 = vld [vmem:[#allocation7 + $0x170] sm:$0xff]
    %v228 = vld [vmem:[#allocation7 + $0x178] sm:$0xff]
    %v229 = vld [vmem:[#allocation7 + $0x180] sm:$0xff]
    %v230 = vld [vmem:[#allocation7 + $0x188] sm:$0xff]
    %v231 = vld [vmem:[#allocation7 + $0x190] sm:$0xff]
    %v232 = vld [vmem:[#allocation7 + $0x198] sm:$0xff]
    %v233 = vld [vmem:[#allocation7 + $0x1a0] sm:$0xff]
    %v234 = vld [vmem:[#allocation7 + $0x1a8] sm:$0xff]
    %v235 = vld [vmem:[#allocation7 + $0x1b0] sm:$0xff]
    %v236 = vld [vmem:[#allocation7 + $0x1b8] sm:$0xff]
    %v237 = vld [vmem:[#allocation7 + $0x1c0] sm:$0xff]
    %v238 = vld [vmem:[#allocation7 + $0x1c8] sm:$0xff]
    %v239 = vld [vmem:[#allocation7 + $0x1d0] sm:$0xff]
    %v240 = vld [vmem:[#allocation7 + $0x1d8] sm:$0xff]
    %v241 = vld [vmem:[#allocation7 + $0x1e0] sm:$0xff]
    %v242 = vld [vmem:[#allocation7 + $0x1e8] sm:$0xff]
    %v243 = vld [vmem:[#allocation7 + $0x1f0] sm:$0xff]
    %v244 = vld [vmem:[#allocation7 + $0x1f8] sm:$0xff]
    %v245 = vld [vmem:[%s4] sm:$0x3]
    %v247 = vlaneseq
    %v248 = vshrl.u32 %v247, 7
    %v249 = vsub.s32 0, %v248
    %v250 = vrot.slane %v245, %v249
    %v251 = vlaneseq
    %v252 = vshrl.u32 %v251, 7
    %v253 = vsub.s32 1, %v252
    %v254 = vrot.slane %v245, %v253
    %257 = vmatprep.subr.mxu0 %v182
    %258 = vmatpush1.msra.mxu0 %v181
    %259 = vmatprep.subr.mxu0 %v184
    %260 = vmatpush1.msra.mxu0 %v183
    %261 = vmatprep.subr.mxu0 %v186
    %262 = vmatpush1.msra.mxu0 %v185
    %263 = vmatprep.subr.mxu0 %v188
    %264 = vmatpush1.msra.mxu0 %v187
    %265 = vmatprep.subr.mxu0 %v190
    %266 = vmatpush1.msra.mxu0 %v189
    %267 = vmatprep.subr.mxu0 %v192
    %268 = vmatpush1.msra.mxu0 %v191
    %269 = vmatprep.subr.mxu0 %v194
    %270 = vmatpush1.msra.mxu0 %v193
    %271 = vmatprep.subr.mxu0 %v196
    %272 = vmatpush1.msra.mxu0 %v195
    %273 = vmatprep.subr.mxu0 %v198
    %274 = vmatpush1.msra.mxu0 %v197
    %275 = vmatprep.subr.mxu0 %v200
    %276 = vmatpush1.msra.mxu0 %v199
    %277 = vmatprep.subr.mxu0 %v202
    %278 = vmatpush1.msra.mxu0 %v201
    %279 = vmatprep.subr.mxu0 %v204
    %280 = vmatpush1.msra.mxu0 %v203
    %281 = vmatprep.subr.mxu0 %v206
    %282 = vmatpush1.msra.mxu0 %v205
    %283 = vmatprep.subr.mxu0 %v208
    %284 = vmatpush1.msra.mxu0 %v207
    %285 = vmatprep.subr.mxu0 %v210
    %286 = vmatpush1.msra.mxu0 %v209
    %287 = vmatprep.subr.mxu0 %v212
    %288 = vmatpush1.msra.mxu0 %v211
    %289 = vmatprep.subr.mxu0 %v214
    %290 = vmatpush1.msra.mxu0 %v213
    %291 = vmatprep.subr.mxu0 %v216
    %292 = vmatpush1.msra.mxu0 %v215
    %293 = vmatprep.subr.mxu0 %v218
    %294 = vmatpush1.msra.mxu0 %v217
    %295 = vmatprep.subr.mxu0 %v220
    %296 = vmatpush1.msra.mxu0 %v219
    %297 = vmatprep.subr.mxu0 %v222
    %298 = vmatpush1.msra.mxu0 %v221
    %299 = vmatprep.subr.mxu0 %v224
    %300 = vmatpush1.msra.mxu0 %v223
    %301 = vmatprep.subr.mxu0 %v226
    %302 = vmatpush1.msra.mxu0 %v225
    %303 = vmatprep.subr.mxu0 %v228
    %304 = vmatpush1.msra.mxu0 %v227
    %305 = vmatprep.subr.mxu0 %v230
    %306 = vmatpush1.msra.mxu0 %v229
    %307 = vmatprep.subr.mxu0 %v232
    %308 = vmatpush1.msra.mxu0 %v231
    %309 = vmatprep.subr.mxu0 %v234
    %310 = vmatpush1.msra.mxu0 %v233
    %311 = vmatprep.subr.mxu0 %v236
    %312 = vmatpush1.msra.mxu0 %v235
    %313 = vmatprep.subr.mxu0 %v238
    %314 = vmatpush1.msra.mxu0 %v237
    %315 = vmatprep.subr.mxu0 %v240
    %316 = vmatpush1.msra.mxu0 %v239
    %317 = vmatprep.subr.mxu0 %v242
    %318 = vmatpush1.msra.mxu0 %v241
    %319 = vmatprep.subr.mxu0 %v244
    %320 = vmatpush1.msra.mxu0 %v243
    %321 = vmatprep.mubr.f32.mxu0 %v180
    %322 = vmatmul.mubr.f32.gmra.mrb[0].mxu0 %v179
    %v323 = vpop.f32.mrb[0].mxu0
    %v324 = vadd.f32 %v250, %v323
    %v325 = vpop.f32.mrb[0].mxu0
    %v326 = vadd.f32 %v254, %v325
    %327 = vdwg.mxu0
    %v328 = vmax.f32 %v324, 0.0
    %v329 = vmax.f32 %v326, 0.0
    %v330 = vld [vmem:[#allocation8] sm:$0xff]
    %v331 = vld [vmem:[#allocation8 + $0x8] sm:$0xff]
    %v332 = vld [vmem:[#allocation8 + $0x10] sm:$0xff]
    %v333 = vld [vmem:[#allocation8 + $0x18] sm:$0xff]
    %v334 = vld [vmem:[#allocation8 + $0x20] sm:$0xff]
    %v335 = vld [vmem:[#allocation8 + $0x28] sm:$0xff]
    %v336 = vld [vmem:[#allocation8 + $0x30] sm:$0xff]
    %v337 = vld [vmem:[#allocation8 + $0x38] sm:$0xff]
    %v338 = vld [vmem:[#allocation8 + $0x40] sm:$0xff]
    %v339 = vld [vmem:[#allocation8 + $0x48] sm:$0xff]
    %v340 = vld [vmem:[#allocation8 + $0x50] sm:$0xff]
    %v341 = vld [vmem:[#allocation8 + $0x58] sm:$0xff]
    %v342 = vld [vmem:[#allocation8 + $0x60] sm:$0xff]
    %v343 = vld [vmem:[#allocation8 + $0x68] sm:$0xff]
    %v344 = vld [vmem:[#allocation8 + $0x70] sm:$0xff]
    %v345 = vld [vmem:[#allocation8 + $0x78] sm:$0xff]
    %v346 = vld [vmem:[#allocation8 + $0x80] sm:$0xff]
    %v347 = vld [vmem:[#allocation8 + $0x88] sm:$0xff]
    %v348 = vld [vmem:[#allocation8 + $0x90] sm:$0xff]
    %v349 = vld [vmem:[#allocation8 + $0x98] sm:$0xff]
    %v350 = vld [vmem:[#allocation8 + $0xa0] sm:$0xff]
    %v351 = vld [vmem:[#allocation8 + $0xa8] sm:$0xff]
    %v352 = vld [vmem:[#allocation8 + $0xb0] sm:$0xff]
    %v353 = vld [vmem:[#allocation8 + $0xb8] sm:$0xff]
    %v354 = vld [vmem:[#allocation8 + $0xc0] sm:$0xff]
    %v355 = vld [vmem:[#allocation8 + $0xc8] sm:$0xff]
    %v356 = vld [vmem:[#allocation8 + $0xd0] sm:$0xff]
    %v357 = vld [vmem:[#allocation8 + $0xd8] sm:$0xff]
    %v358 = vld [vmem:[#allocation8 + $0xe0] sm:$0xff]
    %v359 = vld [vmem:[#allocation8 + $0xe8] sm:$0xff]
    %v360 = vld [vmem:[#allocation8 + $0xf0] sm:$0xff]
    %v361 = vld [vmem:[#allocation8 + $0xf8] sm:$0xff]
    %v362 = vld [vmem:[%s6] sm:$0x1]
    %v364 = vlaneseq
    %v365 = vshrl.u32 %v364, 7
    %v366 = vsub.s32 0, %v365
    %v367 = vrot.slane %v362, %v366
    %369 = vmatprep.subr.mxu0 0.0
    %370 = vmatpush1.msra.mxu0 %v330
    %371 = vmatprep.subr.mxu0 0.0
    %372 = vmatpush1.msra.mxu0 %v331
    %373 = vmatprep.subr.mxu0 0.0
    %374 = vmatpush1.msra.mxu0 %v332
    %375 = vmatprep.subr.mxu0 0.0
    %376 = vmatpush1.msra.mxu0 %v333
    %377 = vmatprep.subr.mxu0 0.0
    %378 = vmatpush1.msra.mxu0 %v334
    %379 = vmatprep.subr.mxu0 0.0
    %380 = vmatpush1.msra.mxu0 %v335
    %381 = vmatprep.subr.mxu0 0.0
    %382 = vmatpush1.msra.mxu0 %v336
    %383 = vmatprep.subr.mxu0 0.0
    %384 = vmatpush1.msra.mxu0 %v337
    %385 = vmatprep.subr.mxu0 0.0
    %386 = vmatpush1.msra.mxu0 %v338
    %387 = vmatprep.subr.mxu0 0.0
    %388 = vmatpush1.msra.mxu0 %v339
    %389 = vmatprep.subr.mxu0 0.0
    %390 = vmatpush1.msra.mxu0 %v340
    %391 = vmatprep.subr.mxu0 0.0
    %392 = vmatpush1.msra.mxu0 %v341
    %393 = vmatprep.subr.mxu0 0.0
    %394 = vmatpush1.msra.mxu0 %v342
    %395 = vmatprep.subr.mxu0 0.0
    %396 = vmatpush1.msra.mxu0 %v343
    %397 = vmatprep.subr.mxu0 0.0
    %398 = vmatpush1.msra.mxu0 %v344
    %399 = vmatprep.subr.mxu0 0.0
    %400 = vmatpush1.msra.mxu0 %v345
    %401 = vmatprep.subr.mxu0 0.0
    %402 = vmatpush1.msra.mxu0 %v346
    %403 = vmatprep.subr.mxu0 0.0
    %404 = vmatpush1.msra.mxu0 %v347
    %405 = vmatprep.subr.mxu0 0.0
    %406 = vmatpush1.msra.mxu0 %v348
    %407 = vmatprep.subr.mxu0 0.0
    %408 = vmatpush1.msra.mxu0 %v349
    %409 = vmatprep.subr.mxu0 0.0
    %410 = vmatpush1.msra.mxu0 %v350
    %411 = vmatprep.subr.mxu0 0.0
    %412 = vmatpush1.msra.mxu0 %v351
    %413 = vmatprep.subr.mxu0 0.0
    %414 = vmatpush1.msra.mxu0 %v352
    %415 = vmatprep.subr.mxu0 0.0
    %416 = vmatpush1.msra.mxu0 %v353
    %417 = vmatprep.subr.mxu0 0.0
    %418 = vmatpush1.msra.mxu0 %v354
    %419 = vmatprep.subr.mxu0 0.0
    %420 = vmatpush1.msra.mxu0 %v355
    %421 = vmatprep.subr.mxu0 0.0
    %422 = vmatpush1.msra.mxu0 %v356
    %423 = vmatprep.subr.mxu0 0.0
    %424 = vmatpush1.msra.mxu0 %v357
    %425 = vmatprep.subr.mxu0 0.0
    %426 = vmatpush1.msra.mxu0 %v358
    %427 = vmatprep.subr.mxu0 0.0
    %428 = vmatpush1.msra.mxu0 %v359
    %429 = vmatprep.subr.mxu0 0.0
    %430 = vmatpush1.msra.mxu0 %v360
    %431 = vmatprep.subr.mxu0 0.0
    %432 = vmatpush1.msra.mxu0 %v361
    %433 = vmatprep.mubr.f32.mxu0 %v329
    %434 = vmatmul.mubr.f32.gmra.mrb[0].mxu0 %v328
    %v435 = vpop.f32.mrb[0].mxu0
    %v436 = vadd.f32 %v367, %v435
    %v437 = vpop.f32.mrb[0].mxu0
    %438 = vdwg.mxu0
    %v439 = vtanh.pop %v436
    %440 = vst [vmem:[#allocation10] sm:$0xff] %v439
    // Predicated region
    $region46: #{tpu_custom_call.1} parent=1 // pred_check
      _
    $region47: #{tpu_custom_call.1} parent=1 // pred_check_branch
      %442 = sbr.rel (0) target = $region49
    $region48: #{tpu_custom_call.1} parent=1 // pred_region
      %s444 = ssub.s32 128, 128
      %445 = vsyncadd [#allocation4], %s444
      %s447 = sshll.u32 [#allocation10], 4
      %s448 = int_to_ptr.vmem [resolvable:$true] %s447
      %450 = dma.vmem_to_hbm [thread:$0]  %s448, 128, %s7, [#allocation4]
    $region49: #{tpu_custom_call.1} parent=1 // pred_fallthru
      _
    // Predicated region
    $region50: #{tpu_custom_call.1} parent=1 // pred_check
      _
    $region51: #{tpu_custom_call.1} parent=1 // pred_check_branch
      %452 = sbr.rel (0) target = $region53
    $region52: #{tpu_custom_call.1} parent=1 // pred_region
      %453 = dma.done [#allocation4], 128
    $region53: #{tpu_custom_call.1} parent=1 // pred_fallthru
      _
    %454 = vsyncpa [#allocation3], 1
    %455 = vsyncpa [#allocation6], 1
    %456 = vsyncpa [#allocation9], 1
    %457 = vsyncpa [#allocation4], 1

</llo_original>
